<compile_context>
chip_gen: v7x
topology: tpu7x:2x2x1
jax: 0.10.0
libtpu: 0.0.40
codegen_flags: <defaults>
</compile_context>

<pallas_src>
import math

import jax
import jax.numpy as jnp
from jax.experimental import pallas as pl
from jax.experimental.pallas import tpu as pltpu

SIGMA_DATA = 0.5  # EDM preconditioning constant of the synthetic denoiser


# ----------------------------------------------------------------------------
# Host-side (float64) scalar schedule, mirroring get_rev_ts + the '2ab'
# multistep (order2_fn / res_x0_rk2_step / reg_x0_euler_step) coefficients.
# ----------------------------------------------------------------------------
def _get_rev_ts(t_min, t_max, num_steps, order):
    a = t_max ** (1.0 / order)
    b = t_min ** (1.0 / order)
    return [(a + (i / num_steps) * (b - a)) ** order for i in range(num_steps + 1)]


def _precond(sigma):
    s2 = sigma * sigma
    d2 = SIGMA_DATA * SIGMA_DATA
    c_skip = d2 / (s2 + d2)
    c_out = sigma * SIGMA_DATA / math.sqrt(s2 + d2)
    c_in = 1.0 / math.sqrt(s2 + d2)
    return c_skip, c_out, c_in


def _solver_coefficients(num_steps, sigma_min, sigma_max, rho,
                         s_churn, s_t_min, s_t_max, s_noise):
    """Flat f32 table (1-D to avoid 2-D SMEM padding), stride 8 per step:
       [coef_xs, c1, c2, c_skip, c_out, c_in, 0, 0].
       Row num_steps holds the preconditioning for the final sample_clean call."""
    sigmas = _get_rev_ts(sigma_min, sigma_max, num_steps, rho)
    eta = min(s_churn / (num_steps + 1), math.sqrt(1.2) - 1.0)
    rows = []
    prev_sigma_used = None
    for i in range(num_steps):
        sigma_cur, sigma_next = sigmas[i], sigmas[i + 1]
        if s_t_min < sigma_cur < s_t_max:
            hat = sigma_cur + eta * sigma_cur
            # churn_std = sqrt(hat^2 - sigma^2) * s_noise == 0 when eta == 0
            sigma_cur = hat
        if i == 0 or prev_sigma_used is None:
            # reg_x0_euler_step
            coef_xs = sigma_next / sigma_cur
            c1 = (sigma_cur - sigma_next) / sigma_cur
            c2 = 0.0
        else:
            # res_x0_rk2_step: exponential 2nd-order AB in lambda = -log(sigma)
            lam_s = -math.log(sigma_cur)
            lam_t = -math.log(sigma_next)
            lam_m = -math.log(prev_sigma_used)
            dt = lam_t - lam_s
            r = (lam_m - lam_s) / dt
            phi1 = math.expm1(-dt) / (-dt)
            phi2 = (phi1 - 1.0) / (-dt)
            b1 = phi1 - phi2 / r
            b2 = phi2 / r
            coef_xs = math.exp(-dt)
            c1 = dt * b1
            c2 = dt * b2
        c_skip, c_out, c_in = _precond(sigma_cur)
        rows.append([coef_xs, c1, c2, c_skip, c_out, c_in, 0.0, 0.0])
        prev_sigma_used = sigma_cur
    c_skip, c_out, c_in = _precond(sigmas[-1])  # sample_clean at sigmas_L[-1]
    rows.append([1.0, 0.0, 0.0, c_skip, c_out, c_in, 0.0, 0.0])
    flat = [v for row in rows for v in row]
    return jnp.asarray(flat, dtype=jnp.float32)


# ----------------------------------------------------------------------------
# Pallas kernel: grid = (row_tiles, steps).  x state carried in the resident
# `final` output block; previous x0 carried in per-tile VMEM scratch.
# ----------------------------------------------------------------------------
def _sampler_kernel(coefs_ref,              # SMEM flat [(S+1)*8] (scalar prefetch)
                    x_ref, w_ref, b_ref,    # VMEM inputs (w_ref resident table)
                    final_ref, inter_ref,   # VMEM outputs (final = x carry)
                    x0p_scr):               # VMEM scratch: previous x0 carry
    i = pl.program_id(1)
    n = pl.num_programs(1)
    base = i * 8

    @pl.when(i == 0)
    def _():
        final_ref[...] = x_ref[...]
        x0p_scr[...] = jnp.zeros_like(x0p_scr)

    def denoiser_preact(xv, wv):
        # h = W_fold @ x + b via an unrolled VPU broadcast-MAC over the small
        # (R <= 16) contraction -- avoids pushing a degenerate f32 matmul
        # through the MXU (and its result-FIFO round trip) every step.
        h = wv[:, 0:1] * xv[0:1, :] + b_ref[...]
        for k in range(1, xv.shape[0]):
            h = h + wv[:, k:k + 1] * xv[k:k + 1, :]
        return h

    x = final_ref[...]                                        # [R, TILE_M] f32
    h = denoiser_preact(x, w_ref[i])                          # c_in folded on host
    x0 = coefs_ref[base + 3] * x + coefs_ref[base + 4] * jnp.tanh(h)

    x_next = (coefs_ref[base + 0] * x
              + coefs_ref[base + 1] * x0
              + coefs_ref[base + 2] * x0p_scr[...])

    inter_ref[...] = x_next[None].astype(inter_ref.dtype)     # intermediates[i]
    final_ref[...] = x_next
    x0p_scr[...] = x0

    @pl.when(i == n - 1)
    def _():
        # sample_clean: one extra denoiser call at sigma_min (weight row n)
        base_f = n * 8
        h2 = denoiser_preact(x_next, w_ref[n])
        final_ref[...] = (coefs_ref[base_f + 3] * x_next
                          + coefs_ref[base_f + 4] * jnp.tanh(h2))


def sampler_forward(x_sigma_max_nchw, w, b, *, num_steps=35, sigma_min=0.002,
                    sigma_max=70.0, rho=7.0, S_churn=0.0, S_min=0.0,
                    S_max=float("inf"), S_noise=1.0, solver_option="2ab",
                    tile_m=None):
    assert solver_option == "2ab", "only the multistep '2ab' solver is implemented"
    if S_churn != 0.0:
        # TODO(synk): in-kernel churn noise (pltpu.prng_*) not implemented.
        raise NotImplementedError("S_churn > 0 is not supported in the Pallas kernel")

    in_dtype = x_sigma_max_nchw.dtype
    B, C, H, W = x_sigma_max_nchw.shape
    M = B * H * W

    # sublane packing: fold P chunks of the lane axis onto sublanes when C < 8
    P = 8 // C if (C < 8 and 8 % C == 0) else 1
    R = C * P
    Mp = pl.cdiv(M, P)                        # packed lane count (pre-padding)

    # Tile size: largest multiple of 128 keeping ~7 live [R, TILE_M] f32
    # buffers (2x x_in, 2x final, 2x inter, 1x x0p scratch) under ~8 MiB.
    if tile_m is None:
        tile_m = (8 * 1024 * 1024) // (28 * R)
    TILE_M = max(128, (int(tile_m) // 128) * 128)
    TILE_M = min(TILE_M, pl.cdiv(Mp, 128) * 128)
    Mp_pad = pl.cdiv(Mp, TILE_M) * TILE_M
    num_tiles = Mp_pad // TILE_M
    M1 = Mp_pad * P                           # padded unpacked lane count

    # NCHW -> lane-dense [C, M] (channels on sublanes, B*H*W on lanes), pad,
    # then fold P lane-chunks onto sublanes -> [R, Mp_pad].
    x_cm = jnp.transpose(x_sigma_max_nchw, (1, 0, 2, 3)).reshape(C, M)
    x_cm = x_cm.astype(jnp.float32)
    if M1 != M:
        x_cm = jnp.pad(x_cm, ((0, 0), (0, M1 - M)))
    x_rm = jnp.transpose(x_cm.reshape(C, P, Mp_pad), (1, 0, 2)).reshape(R, Mp_pad)

    coefs = _solver_coefficients(num_steps, sigma_min, sigma_max, rho,
                                 S_churn, S_min, S_max, S_noise)

    # fold c_in into per-step block-diagonal weights: h = (c_in_i * W_blk^T) @ x + b
    c_in_all = coefs.reshape(num_steps + 1, 8)[:, 5]
    wt = jnp.transpose(w.astype(jnp.float32))                      # [C, C]
    w_blk = jnp.kron(jnp.eye(P, dtype=jnp.float32), wt)            # [R, R]
    w_all = c_in_all[:, None, None] * w_blk[None]                  # [S+1, R, R]
    b_blk = jnp.tile(b.astype(jnp.float32), P).reshape(R, 1)       # [R, 1]

    inter_dtype = in_dtype  # cast at the store (state arithmetic stays f32)

    grid_spec = pltpu.PrefetchScalarGridSpec(
        num_scalar_prefetch=1,
        grid=(num_tiles, num_steps),
        in_specs=[
            pl.BlockSpec((R, TILE_M), lambda r, i, c: (0, r)),             # x (step-0 init)
            pl.BlockSpec((num_steps + 1, R, R), lambda r, i, c: (0, 0, 0)),  # resident weights
            pl.BlockSpec((R, 1), lambda r, i, c: (0, 0)),                  # bias column
        ],
        out_specs=[
            pl.BlockSpec((R, TILE_M), lambda r, i, c: (0, r)),             # final (= x carry)
            pl.BlockSpec((1, R, TILE_M), lambda r, i, c: (i, 0, r)),       # per-step intermediates
        ],
        scratch_shapes=[
            pltpu.VMEM((R, TILE_M), jnp.float32),   # previous x0 carry (per tile)
        ],
    )

    final, inter = pl.pallas_call(
        _sampler_kernel,
        grid_spec=grid_spec,
        out_shape=(
            jax.ShapeDtypeStruct((R, Mp_pad), jnp.float32),
            jax.ShapeDtypeStruct((num_steps, R, Mp_pad), inter_dtype),
        ),
        compiler_params=pltpu.CompilerParams(
            dimension_semantics=("parallel", "arbitrary")),
    )(coefs, x_rm, w_all, b_blk)

    # ---- unpack sublane folding + single batched transpose back to NCHW ----
    final_cm = jnp.transpose(final.reshape(P, C, Mp_pad), (1, 0, 2))
    final_cm = final_cm.reshape(C, M1)[:, :M]
    output = jnp.transpose(final_cm.reshape(C, B, H, W), (1, 0, 2, 3)).astype(in_dtype)

    inter_cm = jnp.transpose(inter.reshape(num_steps, P, C, Mp_pad), (0, 2, 1, 3))
    inter_cm = inter_cm.reshape(num_steps, C, M1)[:, :, :M]
    inter_nchw = jnp.transpose(inter_cm.reshape(num_steps, C, B, H, W),
                               (0, 2, 1, 3, 4)).astype(in_dtype)
    intermediates = [inter_nchw[s] for s in range(num_steps)]
    return output, intermediates


# ----------------------------------------------------------------------------
# Plain-JAX reference (same float32 coefficients, [M, C] layout) for a check.
# ----------------------------------------------------------------------------
def _reference(x2d, w, b, coefs_flat, num_steps):
    coefs = coefs_flat.reshape(num_steps + 1, 8)
    w = w.astype(jnp.float32)
    b = b.reshape(1, -1).astype(jnp.float32)

    def denoise(x, row):
        return coefs[row, 3] * x + coefs[row, 4] * jnp.tanh(
            (coefs[row, 5] * x) @ w + b)

    x = x2d
    x0_prev = jnp.zeros_like(x)
    inters = []
    for i in range(num_steps):
        x0 = denoise(x, i)
        x = coefs[i, 0] * x + coefs[i, 1] * x0 + coefs[i, 2] * x0_prev
        x0_prev = x0
        inters.append(x)
    return denoise(x, num_steps), inters


if __name__ == "__main__":
    B, C, H, W = 2, 4, 16, 16
    num_steps = 8
    sigma_max = 70.0

    key = jax.random.PRNGKey(0)
    k1, k2, k3 = jax.random.split(key, 3)
    x_sigma_max = jax.random.normal(k1, (B, C, H, W), dtype=jnp.float32) * sigma_max
    w = jax.random.normal(k2, (C, C), dtype=jnp.float32) * 0.3
    b = jax.random.normal(k3, (C,), dtype=jnp.float32) * 0.1

    out, intermediates = sampler_forward(
        x_sigma_max, w, b, num_steps=num_steps, sigma_max=sigma_max)
    out = jax.block_until_ready(out)
    for t in intermediates:
        jax.block_until_ready(t)

    # sanity check against plain-JAX reference
    coefs = _solver_coefficients(num_steps, 0.002, sigma_max, 7.0,
                                 0.0, 0.0, float("inf"), 1.0)
    x2d = jnp.transpose(x_sigma_max, (0, 2, 3, 1)).reshape(B * H * W, C)
    ref_final, ref_inters = _reference(x2d, w, b, coefs, num_steps)

    def ref_to_nchw(y2d):
        return jnp.transpose(y2d.reshape(B, H, W, C), (0, 3, 1, 2))

    ref_out = ref_to_nchw(ref_final)

    assert bool(jnp.all(jnp.isfinite(out)))
    err = float(jnp.max(jnp.abs(out - ref_out)))
    scale = float(jnp.max(jnp.abs(ref_out))) + 1.0
    assert err <= 1e-2 * scale, f"kernel/reference mismatch: {err}"

    for idx in (0, num_steps - 1):
        ref_inter = ref_to_nchw(ref_inters[idx])
        err_i = float(jnp.max(jnp.abs(intermediates[idx] - ref_inter)))
        scale_i = float(jnp.max(jnp.abs(ref_inter))) + 1.0
        assert err_i <= 1e-2 * scale_i, f"intermediate {idx} mismatch: {err_i}"

    print("KERNEL_OK")
</pallas_src>

<mosaic_0001>
module attributes {stable_mosaic.version = 11 : i64} {
  func.func @_sampler_kernel(%arg0: i32, %arg1: i32, %arg2: memref<72xf32, #tpu.memory_space<smem>>, %arg3: memref<8x256xf32, #tpu.memory_space<vmem>>, %arg4: memref<9x8x8xf32, #tpu.memory_space<vmem>>, %arg5: memref<8x1xf32, #tpu.memory_space<vmem>>, %arg6: memref<8x256xf32, #tpu.memory_space<vmem>>, %arg7: memref<1x8x256xf32, #tpu.memory_space<vmem>>, %arg8: memref<8x256xf32, #tpu.memory_space<vmem>>) attributes {dimension_semantics = [#tpu.dimension_semantics<parallel>, #tpu.dimension_semantics<arbitrary>], iteration_bounds = array<i64: 1, 8>, scalar_prefetch = 1 : i64, scratch_operands = 1 : i64, tpu.core_type = #tpu.core_type<tc>, window_params = [{transform_indices = @transform_0, window_bounds = array<i64: 8, 256>}, {pipeline_mode = #tpu.pipeline_mode<synchronous>, transform_indices = @transform_1, window_bounds = array<i64: 9, 8, 8>}, {pipeline_mode = #tpu.pipeline_mode<synchronous>, transform_indices = @transform_2, window_bounds = array<i64: 8, 1>}, {transform_indices = @transform_3, window_bounds = array<i64: 8, 256>}, {transform_indices = @transform_4, window_bounds = array<i64: 1, 8, 256>}]} {
    %c8_i32 = arith.constant 8 : i32
    %0 = arith.muli %arg1, %c8_i32 : i32
    %c0_i32 = arith.constant 0 : i32
    %1 = arith.cmpi eq, %arg1, %c0_i32 : i32
    %2 = arith.extui %1 : i1 to i32
    %c0_i32_0 = arith.constant 0 : i32
    %3 = arith.cmpi ne, %2, %c0_i32_0 : i32
    scf.if %3 {
      %c0_17 = arith.constant 0 : index
      %c0_18 = arith.constant 0 : index
      %95 = vector.load %arg3[%c0_17, %c0_18] : memref<8x256xf32, #tpu.memory_space<vmem>>, vector<8x256xf32>
      %c0_19 = arith.constant 0 : index
      %c0_20 = arith.constant 0 : index
      %96 = vector.load %arg6[%c0_19, %c0_20] : memref<8x256xf32, #tpu.memory_space<vmem>>, vector<8x256xf32>
      tpu.vector_store %arg6[%c0_19, %c0_20], %95 {strides = array<i32>} : memref<8x256xf32, #tpu.memory_space<vmem>>, vector<8x256xf32>,
      %cst = arith.constant 0.000000e+00 : f32
      %97 = vector.broadcast %cst : f32 to vector<8x256xf32>
      %c0_21 = arith.constant 0 : index
      %c0_22 = arith.constant 0 : index
      %98 = vector.load %arg8[%c0_21, %c0_22] : memref<8x256xf32, #tpu.memory_space<vmem>>, vector<8x256xf32>
      tpu.vector_store %arg8[%c0_21, %c0_22], %97 {strides = array<i32>} : memref<8x256xf32, #tpu.memory_space<vmem>>, vector<8x256xf32>,
    } else {
    }
    %c0 = arith.constant 0 : index
    %c0_1 = arith.constant 0 : index
    %4 = vector.load %arg6[%c0, %c0_1] : memref<8x256xf32, #tpu.memory_space<vmem>>, vector<8x256xf32>
    %5 = arith.index_cast %arg1 : i32 to index
    %c0_2 = arith.constant 0 : index
    %c0_3 = arith.constant 0 : index
    %6 = vector.load %arg4[%5, %c0_2, %c0_3] : memref<9x8x8xf32, #tpu.memory_space<vmem>>, vector<1x8x8xf32>
    %7 = vector.shape_cast %6 : vector<1x8x8xf32> to vector<8x8xf32>
    %8 = vector.extract_strided_slice %7 {offsets = [0, 0], sizes = [8, 1], strides = [1, 1]} : vector<8x8xf32> to vector<8x1xf32>
    %9 = vector.extract_strided_slice %4 {offsets = [0, 0], sizes = [1, 256], strides = [1, 1]} : vector<8x256xf32> to vector<1x256xf32>
    %10 = vector.broadcast %8 : vector<8x1xf32> to vector<8x256xf32>
    %11 = vector.broadcast %9 : vector<1x256xf32> to vector<8x256xf32>
    %12 = arith.mulf %10, %11 : vector<8x256xf32>
    %c0_4 = arith.constant 0 : index
    %c0_5 = arith.constant 0 : index
    %13 = vector.load %arg5[%c0_4, %c0_5] : memref<8x1xf32, #tpu.memory_space<vmem>>, vector<8x1xf32>
    %14 = vector.broadcast %13 : vector<8x1xf32> to vector<8x256xf32>
    %15 = arith.addf %12, %14 : vector<8x256xf32>
    %16 = vector.extract_strided_slice %7 {offsets = [0, 1], sizes = [8, 1], strides = [1, 1]} : vector<8x8xf32> to vector<8x1xf32>
    %17 = vector.extract_strided_slice %4 {offsets = [1, 0], sizes = [1, 256], strides = [1, 1]} : vector<8x256xf32> to vector<1x256xf32>
    %18 = vector.broadcast %16 : vector<8x1xf32> to vector<8x256xf32>
    %19 = vector.broadcast %17 : vector<1x256xf32> to vector<8x256xf32>
    %20 = arith.mulf %18, %19 : vector<8x256xf32>
    %21 = arith.addf %15, %20 : vector<8x256xf32>
    %22 = vector.extract_strided_slice %7 {offsets = [0, 2], sizes = [8, 1], strides = [1, 1]} : vector<8x8xf32> to vector<8x1xf32>
    %23 = vector.extract_strided_slice %4 {offsets = [2, 0], sizes = [1, 256], strides = [1, 1]} : vector<8x256xf32> to vector<1x256xf32>
    %24 = vector.broadcast %22 : vector<8x1xf32> to vector<8x256xf32>
    %25 = vector.broadcast %23 : vector<1x256xf32> to vector<8x256xf32>
    %26 = arith.mulf %24, %25 : vector<8x256xf32>
    %27 = arith.addf %21, %26 : vector<8x256xf32>
    %28 = vector.extract_strided_slice %7 {offsets = [0, 3], sizes = [8, 1], strides = [1, 1]} : vector<8x8xf32> to vector<8x1xf32>
    %29 = vector.extract_strided_slice %4 {offsets = [3, 0], sizes = [1, 256], strides = [1, 1]} : vector<8x256xf32> to vector<1x256xf32>
    %30 = vector.broadcast %28 : vector<8x1xf32> to vector<8x256xf32>
    %31 = vector.broadcast %29 : vector<1x256xf32> to vector<8x256xf32>
    %32 = arith.mulf %30, %31 : vector<8x256xf32>
    %33 = arith.addf %27, %32 : vector<8x256xf32>
    %34 = vector.extract_strided_slice %7 {offsets = [0, 4], sizes = [8, 1], strides = [1, 1]} : vector<8x8xf32> to vector<8x1xf32>
    %35 = vector.extract_strided_slice %4 {offsets = [4, 0], sizes = [1, 256], strides = [1, 1]} : vector<8x256xf32> to vector<1x256xf32>
    %36 = vector.broadcast %34 : vector<8x1xf32> to vector<8x256xf32>
    %37 = vector.broadcast %35 : vector<1x256xf32> to vector<8x256xf32>
    %38 = arith.mulf %36, %37 : vector<8x256xf32>
    %39 = arith.addf %33, %38 : vector<8x256xf32>
    %40 = vector.extract_strided_slice %7 {offsets = [0, 5], sizes = [8, 1], strides = [1, 1]} : vector<8x8xf32> to vector<8x1xf32>
    %41 = vector.extract_strided_slice %4 {offsets = [5, 0], sizes = [1, 256], strides = [1, 1]} : vector<8x256xf32> to vector<1x256xf32>
    %42 = vector.broadcast %40 : vector<8x1xf32> to vector<8x256xf32>
    %43 = vector.broadcast %41 : vector<1x256xf32> to vector<8x256xf32>
    %44 = arith.mulf %42, %43 : vector<8x256xf32>
    %45 = arith.addf %39, %44 : vector<8x256xf32>
    %46 = vector.extract_strided_slice %7 {offsets = [0, 6], sizes = [8, 1], strides = [1, 1]} : vector<8x8xf32> to vector<8x1xf32>
    %47 = vector.extract_strided_slice %4 {offsets = [6, 0], sizes = [1, 256], strides = [1, 1]} : vector<8x256xf32> to vector<1x256xf32>
    %48 = vector.broadcast %46 : vector<8x1xf32> to vector<8x256xf32>
    %49 = vector.broadcast %47 : vector<1x256xf32> to vector<8x256xf32>
    %50 = arith.mulf %48, %49 : vector<8x256xf32>
    %51 = arith.addf %45, %50 : vector<8x256xf32>
    %52 = vector.extract_strided_slice %7 {offsets = [0, 7], sizes = [8, 1], strides = [1, 1]} : vector<8x8xf32> to vector<8x1xf32>
    %53 = vector.extract_strided_slice %4 {offsets = [7, 0], sizes = [1, 256], strides = [1, 1]} : vector<8x256xf32> to vector<1x256xf32>
    %54 = vector.broadcast %52 : vector<8x1xf32> to vector<8x256xf32>
    %55 = vector.broadcast %53 : vector<1x256xf32> to vector<8x256xf32>
    %56 = arith.mulf %54, %55 : vector<8x256xf32>
    %57 = arith.addf %51, %56 : vector<8x256xf32>
    %c3_i32 = arith.constant 3 : i32
    %58 = arith.addi %0, %c3_i32 : i32
    %59 = arith.index_cast %58 : i32 to index
    %60 = memref.load %arg2[%59] : memref<72xf32, #tpu.memory_space<smem>>
    %61 = vector.broadcast %60 : f32 to vector<8x256xf32>
    %62 = arith.mulf %61, %4 : vector<8x256xf32>
    %c4_i32 = arith.constant 4 : i32
    %63 = arith.addi %0, %c4_i32 : i32
    %64 = arith.index_cast %63 : i32 to index
    %65 = memref.load %arg2[%64] : memref<72xf32, #tpu.memory_space<smem>>
    %66 = math.tanh %57 : vector<8x256xf32>
    %67 = vector.broadcast %65 : f32 to vector<8x256xf32>
    %68 = arith.mulf %67, %66 : vector<8x256xf32>
    %69 = arith.addf %62, %68 : vector<8x256xf32>
    %c0_i32_6 = arith.constant 0 : i32
    %70 = arith.addi %0, %c0_i32_6 : i32
    %71 = arith.index_cast %70 : i32 to index
    %72 = memref.load %arg2[%71] : memref<72xf32, #tpu.memory_space<smem>>
    %73 = vector.broadcast %72 : f32 to vector<8x256xf32>
    %74 = arith.mulf %73, %4 : vector<8x256xf32>
    %c1_i32 = arith.constant 1 : i32
    %75 = arith.addi %0, %c1_i32 : i32
    %76 = arith.index_cast %75 : i32 to index
    %77 = memref.load %arg2[%76] : memref<72xf32, #tpu.memory_space<smem>>
    %78 = vector.broadcast %77 : f32 to vector<8x256xf32>
    %79 = arith.mulf %78, %69 : vector<8x256xf32>
    %80 = arith.addf %74, %79 : vector<8x256xf32>
    %c2_i32 = arith.constant 2 : i32
    %81 = arith.addi %0, %c2_i32 : i32
    %82 = arith.index_cast %81 : i32 to index
    %83 = memref.load %arg2[%82] : memref<72xf32, #tpu.memory_space<smem>>
    %c0_7 = arith.constant 0 : index
    %c0_8 = arith.constant 0 : index
    %84 = vector.load %arg8[%c0_7, %c0_8] : memref<8x256xf32, #tpu.memory_space<vmem>>, vector<8x256xf32>
    %85 = vector.broadcast %83 : f32 to vector<8x256xf32>
    %86 = arith.mulf %85, %84 : vector<8x256xf32>
    %87 = arith.addf %80, %86 : vector<8x256xf32>
    %88 = vector.shape_cast %87 : vector<8x256xf32> to vector<1x8x256xf32>
    %c0_9 = arith.constant 0 : index
    %c0_10 = arith.constant 0 : index
    %c0_11 = arith.constant 0 : index
    %89 = vector.load %arg7[%c0_9, %c0_10, %c0_11] : memref<1x8x256xf32, #tpu.memory_space<vmem>>, vector<1x8x256xf32>
    tpu.vector_store %arg7[%c0_9, %c0_10, %c0_11], %88 {strides = array<i32>} : memref<1x8x256xf32, #tpu.memory_space<vmem>>, vector<1x8x256xf32>,
    %c0_12 = arith.constant 0 : index
    %c0_13 = arith.constant 0 : index
    %90 = vector.load %arg6[%c0_12, %c0_13] : memref<8x256xf32, #tpu.memory_space<vmem>>, vector<8x256xf32>
    tpu.vector_store %arg6[%c0_12, %c0_13], %87 {strides = array<i32>} : memref<8x256xf32, #tpu.memory_space<vmem>>, vector<8x256xf32>,
    %c0_14 = arith.constant 0 : index
    %c0_15 = arith.constant 0 : index
    %91 = vector.load %arg8[%c0_14, %c0_15] : memref<8x256xf32, #tpu.memory_space<vmem>>, vector<8x256xf32>
    tpu.vector_store %arg8[%c0_14, %c0_15], %69 {strides = array<i32>} : memref<8x256xf32, #tpu.memory_space<vmem>>, vector<8x256xf32>,
    %c7_i32 = arith.constant 7 : i32
    %92 = arith.cmpi eq, %arg1, %c7_i32 : i32
    %93 = arith.extui %92 : i1 to i32
    %c0_i32_16 = arith.constant 0 : i32
    %94 = arith.cmpi ne, %93, %c0_i32_16 : i32
    scf.if %94 {
      %c8 = arith.constant 8 : index
      %c0_17 = arith.constant 0 : index
      %c0_18 = arith.constant 0 : index
      %95 = vector.load %arg4[%c8, %c0_17, %c0_18] : memref<9x8x8xf32, #tpu.memory_space<vmem>>, vector<1x8x8xf32>
      %96 = vector.shape_cast %95 : vector<1x8x8xf32> to vector<8x8xf32>
      %97 = vector.extract_strided_slice %96 {offsets = [0, 0], sizes = [8, 1], strides = [1, 1]} : vector<8x8xf32> to vector<8x1xf32>
      %98 = vector.extract_strided_slice %87 {offsets = [0, 0], sizes = [1, 256], strides = [1, 1]} : vector<8x256xf32> to vector<1x256xf32>
      %99 = vector.broadcast %97 : vector<8x1xf32> to vector<8x256xf32>
      %100 = vector.broadcast %98 : vector<1x256xf32> to vector<8x256xf32>
      %101 = arith.mulf %99, %100 : vector<8x256xf32>
      %c0_19 = arith.constant 0 : index
      %c0_20 = arith.constant 0 : index
      %102 = vector.load %arg5[%c0_19, %c0_20] : memref<8x1xf32, #tpu.memory_space<vmem>>, vector<8x1xf32>
      %103 = vector.broadcast %102 : vector<8x1xf32> to vector<8x256xf32>
      %104 = arith.addf %101, %103 : vector<8x256xf32>
      %105 = vector.extract_strided_slice %96 {offsets = [0, 1], sizes = [8, 1], strides = [1, 1]} : vector<8x8xf32> to vector<8x1xf32>
      %106 = vector.extract_strided_slice %87 {offsets = [1, 0], sizes = [1, 256], strides = [1, 1]} : vector<8x256xf32> to vector<1x256xf32>
      %107 = vector.broadcast %105 : vector<8x1xf32> to vector<8x256xf32>
      %108 = vector.broadcast %106 : vector<1x256xf32> to vector<8x256xf32>
      %109 = arith.mulf %107, %108 : vector<8x256xf32>
      %110 = arith.addf %104, %109 : vector<8x256xf32>
      %111 = vector.extract_strided_slice %96 {offsets = [0, 2], sizes = [8, 1], strides = [1, 1]} : vector<8x8xf32> to vector<8x1xf32>
      %112 = vector.extract_strided_slice %87 {offsets = [2, 0], sizes = [1, 256], strides = [1, 1]} : vector<8x256xf32> to vector<1x256xf32>
      %113 = vector.broadcast %111 : vector<8x1xf32> to vector<8x256xf32>
      %114 = vector.broadcast %112 : vector<1x256xf32> to vector<8x256xf32>
      %115 = arith.mulf %113, %114 : vector<8x256xf32>
      %116 = arith.addf %110, %115 : vector<8x256xf32>
      %117 = vector.extract_strided_slice %96 {offsets = [0, 3], sizes = [8, 1], strides = [1, 1]} : vector<8x8xf32> to vector<8x1xf32>
      %118 = vector.extract_strided_slice %87 {offsets = [3, 0], sizes = [1, 256], strides = [1, 1]} : vector<8x256xf32> to vector<1x256xf32>
      %119 = vector.broadcast %117 : vector<8x1xf32> to vector<8x256xf32>
      %120 = vector.broadcast %118 : vector<1x256xf32> to vector<8x256xf32>
      %121 = arith.mulf %119, %120 : vector<8x256xf32>
      %122 = arith.addf %116, %121 : vector<8x256xf32>
      %123 = vector.extract_strided_slice %96 {offsets = [0, 4], sizes = [8, 1], strides = [1, 1]} : vector<8x8xf32> to vector<8x1xf32>
      %124 = vector.extract_strided_slice %87 {offsets = [4, 0], sizes = [1, 256], strides = [1, 1]} : vector<8x256xf32> to vector<1x256xf32>
      %125 = vector.broadcast %123 : vector<8x1xf32> to vector<8x256xf32>
      %126 = vector.broadcast %124 : vector<1x256xf32> to vector<8x256xf32>
      %127 = arith.mulf %125, %126 : vector<8x256xf32>
      %128 = arith.addf %122, %127 : vector<8x256xf32>
      %129 = vector.extract_strided_slice %96 {offsets = [0, 5], sizes = [8, 1], strides = [1, 1]} : vector<8x8xf32> to vector<8x1xf32>
      %130 = vector.extract_strided_slice %87 {offsets = [5, 0], sizes = [1, 256], strides = [1, 1]} : vector<8x256xf32> to vector<1x256xf32>
      %131 = vector.broadcast %129 : vector<8x1xf32> to vector<8x256xf32>
      %132 = vector.broadcast %130 : vector<1x256xf32> to vector<8x256xf32>
      %133 = arith.mulf %131, %132 : vector<8x256xf32>
      %134 = arith.addf %128, %133 : vector<8x256xf32>
      %135 = vector.extract_strided_slice %96 {offsets = [0, 6], sizes = [8, 1], strides = [1, 1]} : vector<8x8xf32> to vector<8x1xf32>
      %136 = vector.extract_strided_slice %87 {offsets = [6, 0], sizes = [1, 256], strides = [1, 1]} : vector<8x256xf32> to vector<1x256xf32>
      %137 = vector.broadcast %135 : vector<8x1xf32> to vector<8x256xf32>
      %138 = vector.broadcast %136 : vector<1x256xf32> to vector<8x256xf32>
      %139 = arith.mulf %137, %138 : vector<8x256xf32>
      %140 = arith.addf %134, %139 : vector<8x256xf32>
      %141 = vector.extract_strided_slice %96 {offsets = [0, 7], sizes = [8, 1], strides = [1, 1]} : vector<8x8xf32> to vector<8x1xf32>
      %142 = vector.extract_strided_slice %87 {offsets = [7, 0], sizes = [1, 256], strides = [1, 1]} : vector<8x256xf32> to vector<1x256xf32>
      %143 = vector.broadcast %141 : vector<8x1xf32> to vector<8x256xf32>
      %144 = vector.broadcast %142 : vector<1x256xf32> to vector<8x256xf32>
      %145 = arith.mulf %143, %144 : vector<8x256xf32>
      %146 = arith.addf %140, %145 : vector<8x256xf32>
      %c67 = arith.constant 67 : index
      %147 = memref.load %arg2[%c67] : memref<72xf32, #tpu.memory_space<smem>>
      %148 = vector.broadcast %147 : f32 to vector<8x256xf32>
      %149 = arith.mulf %148, %87 : vector<8x256xf32>
      %c68 = arith.constant 68 : index
      %150 = memref.load %arg2[%c68] : memref<72xf32, #tpu.memory_space<smem>>
      %151 = math.tanh %146 : vector<8x256xf32>
      %152 = vector.broadcast %150 : f32 to vector<8x256xf32>
      %153 = arith.mulf %152, %151 : vector<8x256xf32>
      %154 = arith.addf %149, %153 : vector<8x256xf32>
      %c0_21 = arith.constant 0 : index
      %c0_22 = arith.constant 0 : index
      %155 = vector.load %arg6[%c0_21, %c0_22] : memref<8x256xf32, #tpu.memory_space<vmem>>, vector<8x256xf32>
      tpu.vector_store %arg6[%c0_21, %c0_22], %154 {strides = array<i32>} : memref<8x256xf32, #tpu.memory_space<vmem>>, vector<8x256xf32>,
    } else {
    }
    return
  }
  func.func @transform_0(%arg0: i32, %arg1: i32, %arg2: memref<72xf32, #tpu.memory_space<smem>>) -> (i32, i32) {
    %c0_i32 = arith.constant 0 : i32
    %c0_i32_0 = arith.constant 0 : i32
    return %c0_i32, %arg0 : i32, i32
  }
  func.func @transform_1(%arg0: i32, %arg1: i32, %arg2: memref<72xf32, #tpu.memory_space<smem>>) -> (i32, i32, i32) {
    %c0_i32 = arith.constant 0 : i32
    %c0_i32_0 = arith.constant 0 : i32
    %c0_i32_1 = arith.constant 0 : i32
    %c0_i32_2 = arith.constant 0 : i32
    return %c0_i32, %c0_i32_0, %c0_i32_1 : i32, i32, i32
  }
  func.func @transform_2(%arg0: i32, %arg1: i32, %arg2: memref<72xf32, #tpu.memory_space<smem>>) -> (i32, i32) {
    %c0_i32 = arith.constant 0 : i32
    %c0_i32_0 = arith.constant 0 : i32
    %c0_i32_1 = arith.constant 0 : i32
    return %c0_i32, %c0_i32_0 : i32, i32
  }
  func.func @transform_3(%arg0: i32, %arg1: i32, %arg2: memref<72xf32, #tpu.memory_space<smem>>) -> (i32, i32) {
    %c0_i32 = arith.constant 0 : i32
    %c0_i32_0 = arith.constant 0 : i32
    return %c0_i32, %arg0 : i32, i32
  }
  func.func @transform_4(%arg0: i32, %arg1: i32, %arg2: memref<72xf32, #tpu.memory_space<smem>>) -> (i32, i32, i32) {
    %c0_i32 = arith.constant 0 : i32
    %c0_i32_0 = arith.constant 0 : i32
    return %arg1, %c0_i32, %arg0 : i32, i32, i32
  }
}

</mosaic_0001>

<llo_original>
// kernel: tpu_custom_call.1
$region0: #{tpu_custom_call.1}
  #allocation0 [shape = 'u32[]', space=smem, size = 0x4, offset = 0x4, fixed_abs, tag = 'smem constant byte address 0x4 - core index']
  #allocation1 [shape = 'u32[144,128]{1,0:T(1,128)}', space=vmem, size = 0x12000, scoped, tag = 'internal scratch']
  #allocation2 [shape = 'f32[8,256]{1,0:T(8,128)}', space=vmem, size = 0x2000, scoped, tag = 'scratch operand']
  #allocation3 [shape = 's32[1]{0}', space=sflag, size = 0x4, scoped, tag = 'scoped memory for tpu_custom_call.1']
  #allocation4 [shape = 'u8[512]{0}', space=smem, size = 0x200, scoped, tag = 'prefetched SMEM operand 0']
  %s0 = inlined_call_operand.vmem [shape: f32[72], index: 0, kind: input, shape index: {}]
  %s1 = inlined_call_operand.vmem [shape: f32[8,256], index: 1, kind: input, shape index: {}]
  %s2 = inlined_call_operand.vmem [shape: f32[9,8,8], index: 2, kind: input, shape index: {}]
  %s3 = inlined_call_operand.vmem [shape: f32[8,1], index: 3, kind: input, shape index: {}]
  %s4 = inlined_call_operand.hbm [shape: f32[8,256], index: 4, kind: output, shape index: {0}]
  %s5 = inlined_call_operand.hbm [shape: f32[8,8,256], index: 5, kind: output, shape index: {1}]
  %6 = xla_tuple %s4, %s5
  %s7 = sld [smem:[#allocation0]]
  $region61: #{tpu_custom_call.1} parent=0
    _
  %s9 = ssub.s32 1, %s7
  %s10 = scalar_select 0, %s9, %s7
  %s11 = sshll.u32 %s0, 4
  %s12 = int_to_ptr.vmem [resolvable:$true] %s11
  %14 = dma.vmem_to_smem %s12, 16, [#allocation4], [#allocation3]
  %15 = dma.done [#allocation3], 16
  %16 = sfence
  $region1: #{tpu_custom_call.1} parent=0
    #allocation5 [shape = 'u8[8192]{0}', space=vmem, size = 0x2000, scoped, tag = 'output window, operand 0, single buffered']
    #allocation6 [shape = 's32[2]{0}', space=sflag, size = 0x8, scoped, tag = 'scoped memory for tpu_custom_call.1']
    #allocation7 [shape = 'u8[16384]{0}', space=vmem, size = 0x4000, scoped, tag = 'output window, operand 1']
    #allocation8 [shape = 's32[2]{0}', space=sflag, size = 0x8, scoped, tag = 'scoped memory for tpu_custom_call.1']
    %17 = vsyncpa [#allocation6], 0
    %18 = vsyncpa [#allocation8], 0
    %s19 = scalar_lea.sflag [#allocation8], 1
    %20 = vsyncpa %s19, 0
    loop: start=0, step=1, limit=10
    $region2: #{tpu_custom_call.1} parent=1 // loop_pre_header
      _
    $region3: #{tpu_custom_call.1} parent=1 // loop_header
      %s22 = sphi 0, %s26
      %p23 = scmp.ge.s32.totalorder %s22, 10
      %s29 = sphi 0, %s41
      %s30 = sphi 0, %s37
      %s31 = sphi 0, %s29
      %s32 = sphi 0, %s30
      %s33 = sphi 0, %s31
      %s34 = sphi 0, %s32
      %s44 = sphi 0, %s46
      %s47 = sphi 0, %s44
      %s48 = sphi 0, %s47
      %s64 = sphi 0, %s48
      %s68 = sphi 0, %s68
      %s70 = sphi 0, %s68
      %s71 = sphi 0, %s70
      %s85 = sphi 0, %s71
      %s89 = sphi 0, %s89
      %s91 = sphi 0, %s89
      %s92 = sphi 0, %s91
      %s106 = sphi 0, %s92
      %s112 = sphi 0, %s114
      %s115 = sphi 0, %s112
      %s116 = sphi 0, %s115
      %s132 = sphi 0, %s116
      %s140 = sphi 0, %s142
      %s143 = sphi 0, %s140
      %s144 = sphi 0, %s143
      %s160 = sphi 0, %s144
    $region4: #{tpu_custom_call.1} parent=1 // loop_header_branch
      %25 = sbr.rel (%p23) target = $region8
    $region5: #{tpu_custom_call.1} parent=1 // loop_body
      %s27 = ssub.s32 %s22, 1
      %s28 = ssub.s32 %s22, 2
      %s35 = sadd.s32 1, %s30
      %p36 = scmp.ge.s32.totalorder %s35, 8
      %s37 = scalar_select %p36, 0, %s35
      %s38 = sadd.s32 1, %s29
      %s39 = scalar_select %p36, %s38, %s29
      %p40 = scmp.ge.s32.totalorder %s39, 1
      %s41 = scalar_select %p40, 0, %s39
      %s42 = ssub.s32 %s29, %s41
      %p43 = scmp.eq.s32.totalorder %s42, 0
      %s45 = sadd.s32 %s44, 1
      %s46 = scalar_select %p43, %s44, %s45
      %p49 = pneg %p43
      %p50 = scmp.eq.s32.totalorder %s22, 7
      %p51 = por %p49, %p50
      %p52 = scmp.ne.s32.totalorder %s44, %s47
      %p53 = scmp.eq.s32.totalorder %s22, 0
      %p54 = por %p52, %p53
      %p55 = scmp.ne.s32.totalorder %s44, %s47
      %p56 = scmp.eq.s32.totalorder %s27, 7
      %p57 = por %p55, %p56
      %p58 = scmp.ne.s32.totalorder %s47, %s48
      %p59 = scmp.eq.s32.totalorder %s27, 0
      %p60 = por %p58, %p59
      %p61 = scmp.ne.s32.totalorder %s47, %s48
      %p62 = scmp.eq.s32.totalorder %s28, 7
      %p63 = por %p61, %p62
      %p65 = scmp.ne.s32.totalorder %s48, %s64
      %p66 = scmp.eq.s32.totalorder %s28, 0
      %p67 = por %p65, %p66
      %s69 = sadd.s32 %s68, 1
      %p72 = scmp.eq.s32.totalorder %s22, 7
      %p73 = scmp.ne.s32.totalorder %s68, %s70
      %p74 = scmp.eq.s32.totalorder %s22, 0
      %p75 = por %p73, %p74
      %p76 = scmp.ne.s32.totalorder %s68, %s70
      %p77 = scmp.eq.s32.totalorder %s27, 7
      %p78 = por %p76, %p77
      %p79 = scmp.ne.s32.totalorder %s70, %s71
      %p80 = scmp.eq.s32.totalorder %s27, 0
      %p81 = por %p79, %p80
      %p82 = scmp.ne.s32.totalorder %s70, %s71
      %p83 = scmp.eq.s32.totalorder %s28, 7
      %p84 = por %p82, %p83
      %p86 = scmp.ne.s32.totalorder %s71, %s85
      %p87 = scmp.eq.s32.totalorder %s28, 0
      %p88 = por %p86, %p87
      %s90 = sadd.s32 %s89, 1
      %p93 = scmp.eq.s32.totalorder %s22, 7
      %p94 = scmp.ne.s32.totalorder %s89, %s91
      %p95 = scmp.eq.s32.totalorder %s22, 0
      %p96 = por %p94, %p95
      %p97 = scmp.ne.s32.totalorder %s89, %s91
      %p98 = scmp.eq.s32.totalorder %s27, 7
      %p99 = por %p97, %p98
      %p100 = scmp.ne.s32.totalorder %s91, %s92
      %p101 = scmp.eq.s32.totalorder %s27, 0
      %p102 = por %p100, %p101
      %p103 = scmp.ne.s32.totalorder %s91, %s92
      %p104 = scmp.eq.s32.totalorder %s28, 7
      %p105 = por %p103, %p104
      %p107 = scmp.ne.s32.totalorder %s92, %s106
      %p108 = scmp.eq.s32.totalorder %s28, 0
      %p109 = por %p107, %p108
      %s110 = ssub.s32 %s29, %s41
      %p111 = scmp.eq.s32.totalorder %s110, 0
      %s113 = sadd.s32 %s112, 1
      %s114 = scalar_select %p111, %s112, %s113
      %p117 = pneg %p111
      %p118 = scmp.eq.s32.totalorder %s22, 7
      %p119 = por %p117, %p118
      %p120 = scmp.ne.s32.totalorder %s112, %s115
      %p121 = scmp.eq.s32.totalorder %s22, 0
      %p122 = por %p120, %p121
      %p123 = scmp.ne.s32.totalorder %s112, %s115
      %p124 = scmp.eq.s32.totalorder %s27, 7
      %p125 = por %p123, %p124
      %p126 = scmp.ne.s32.totalorder %s115, %s116
      %p127 = scmp.eq.s32.totalorder %s27, 0
      %p128 = por %p126, %p127
      %p129 = scmp.ne.s32.totalorder %s115, %s116
      %p130 = scmp.eq.s32.totalorder %s28, 7
      %p131 = por %p129, %p130
      %p133 = scmp.ne.s32.totalorder %s116, %s132
      %p134 = scmp.eq.s32.totalorder %s28, 0
      %p135 = por %p133, %p134
      %s136 = ssub.s32 %s30, %s37
      %s137 = ssub.s32 %s29, %s41
      %s138 = sor.u32 %s136, %s137
      %p139 = scmp.eq.s32.totalorder %s138, 0
      %s141 = sadd.s32 %s140, 1
      %s142 = scalar_select %p139, %s140, %s141
      %p145 = pneg %p139
      %p146 = scmp.eq.s32.totalorder %s22, 7
      %p147 = por %p145, %p146
      %p148 = scmp.ne.s32.totalorder %s140, %s143
      %p149 = scmp.eq.s32.totalorder %s22, 0
      %p150 = por %p148, %p149
      %p151 = scmp.ne.s32.totalorder %s140, %s143
      %p152 = scmp.eq.s32.totalorder %s27, 7
      %p153 = por %p151, %p152
      %p154 = scmp.ne.s32.totalorder %s143, %s144
      %p155 = scmp.eq.s32.totalorder %s27, 0
      %p156 = por %p154, %p155
      %p157 = scmp.ne.s32.totalorder %s143, %s144
      %p158 = scmp.eq.s32.totalorder %s28, 7
      %p159 = por %p157, %p158
      %p161 = scmp.ne.s32.totalorder %s144, %s160
      %p162 = scmp.eq.s32.totalorder %s28, 0
      %p163 = por %p161, %p162
      %p164 = scmp.le.s32.totalorder 1, %s22
      %p165 = scmp.lt.s32.totalorder %s22, 9
      %p166 = pnand %p164, %p165
      %p167 = pneg %p166
      // Predicated region
      $region9: #{tpu_custom_call.1} parent=5 // pred_check
        _
      $region10: #{tpu_custom_call.1} parent=5 // pred_check_branch
        %169 = sbr.rel (%p166) target = $region12
      $region11: #{tpu_custom_call.1} parent=5 // pred_region
        %s170 = ssub.s32 %s22, 1
        // Predicated region
        $region13: #{tpu_custom_call.1} parent=11 // pred_check
          %p171 = pneg %p60
        $region14: #{tpu_custom_call.1} parent=11 // pred_check_branch
          %173 = sbr.rel (%p171) target = $region16
        $region15: #{tpu_custom_call.1} parent=11 // pred_region
          %s174 = smul.u32 2, %s31
          %p175 = scmp.lt.s32.totalorder %s174, 1
          %s176 = scalar_select %p175, %s174, 1
          %s177 = smul.addr %s176, 8
          %s178 = scalar_lea.vmem %s1, %s177
          %s179 = smul.u32 2, %s31
        $region16: #{tpu_custom_call.1} parent=11 // pred_fallthru
          _
        // Predicated region
        $region17: #{tpu_custom_call.1} parent=11 // pred_check
          %p180 = pneg %p81
        $region18: #{tpu_custom_call.1} parent=11 // pred_check_branch
          %182 = sbr.rel (%p180) target = $region20
        $region19: #{tpu_custom_call.1} parent=11 // pred_region
          _
        $region20: #{tpu_custom_call.1} parent=11 // pred_fallthru
          _
        // Predicated region
        $region21: #{tpu_custom_call.1} parent=11 // pred_check
          %p183 = pneg %p102
        $region22: #{tpu_custom_call.1} parent=11 // pred_check_branch
          %185 = sbr.rel (%p183) target = $region24
        $region23: #{tpu_custom_call.1} parent=11 // pred_region
          _
        $region24: #{tpu_custom_call.1} parent=11 // pred_fallthru
          _
      $region12: #{tpu_custom_call.1} parent=5 // pred_fallthru
        _
      %p186 = scmp.lt.s32.totalorder %s22, 8
      // Predicated region
      $region25: #{tpu_custom_call.1} parent=5 // pred_check
        %p187 = pneg %p186
      $region26: #{tpu_custom_call.1} parent=5 // pred_check_branch
        %189 = sbr.rel (%p187) target = $region28
      $region27: #{tpu_custom_call.1} parent=5 // pred_region
        _
      $region28: #{tpu_custom_call.1} parent=5 // pred_fallthru
        _
      %p190 = scmp.le.s32.totalorder 1, %s22
      %p191 = scmp.lt.s32.totalorder %s22, 9
      %p192 = pnand %p190, %p191
      %p193 = pneg %p192
      // Predicated region
      $region29: #{tpu_custom_call.1} parent=5 // pred_check
        _
      $region30: #{tpu_custom_call.1} parent=5 // pred_check_branch
        %195 = sbr.rel (%p192) target = $region32
      $region31: #{tpu_custom_call.1} parent=5 // pred_region
        %s196 = ssub.s32 %s22, 1
        %s197 = smul.u32 2, %s31
        %p198 = scmp.lt.s32.totalorder %s197, 1
        %s199 = scalar_select %p198, %s197, 1
        %s200 = smul.addr %s199, 8
        %s201 = scalar_lea.vmem %s1, %s200
        %p202 = pneg %p60
        %p203 = pneg %p57
        %p204 = pneg %p81
        %p205 = pneg %p78
        %p206 = pneg %p102
        %p207 = pneg %p99
        %p208 = pneg %p128
        %p209 = pneg %p125
        %p210 = pneg %p156
        %p211 = pneg %p153
        %s212 = sand.u32 %s143, 1
        %s213 = scalar_lea.sflag [#allocation8], %s212
        %s214 = sand.u32 %s143, 1
        %s215 = smul.addr %s214, 16
        %s216 = scalar_lea.vmem [#allocation7], %s215
        %s217 = smul.u32 2, %s31
        %p218 = scmp.lt.s32.totalorder %s217, 1
        %s219 = scalar_select %p218, %s217, 1
        %s220 = smul.addr %s219, 8
        %s221 = scalar_lea.vmem %s1, %s220
        %s222 = smul.u32 2, %s31
        %s223 = smul.u32 2, %s31
        %s224 = smul.u32 2, %s31
        %s225 = smul.u32 %s32, 8
        %p226 = scmp.eq.s32.totalorder %s32, 0
        // Predicated region
        $region33: #{tpu_custom_call.1} parent=31 // pred_check
          %p227 = pneg %p226
        $region34: #{tpu_custom_call.1} parent=31 // pred_check_branch
          %229 = sbr.rel (%p227) target = $region36
        $region35: #{tpu_custom_call.1} parent=31 // pred_region
          %v230 = vld [vmem:[%s221] sm:$0xff]
          %v231 = vld [vmem:[%s221 + $0x8] sm:$0xff]
          %232 = vst [vmem:[#allocation5] sm:$0xff] %v230
          %233 = vst [vmem:[#allocation5 + $0x8] sm:$0xff] %v231
          %234 = vst [vmem:[#allocation2] sm:$0xff] 0.0
          %235 = vst [vmem:[#allocation2 + $0x8] sm:$0xff] 0.0
        $region36: #{tpu_custom_call.1} parent=31 // pred_fallthru
          _
        %v236 = vld [vmem:[#allocation5] sm:$0xff]
        %v237 = vld [vmem:[#allocation5 + $0x8] sm:$0xff]
        %s238 = scalar_lea.vmem %s2, %s225
        %v239 = vld [vmem:[%s238] sm:$0xff]
        %241 = vset.pattern.permute.xlu0 0
        %242 = vperm.xlu0 %241, %v239
        %v243 = vpop.permute.xlu0 %242
        %v245 = vlaneseq
        %v246 = vshrl.u32 %v245, 7
        %v247 = vsub.s32 0, %v246
        %v248 = vrot.slane %v236, %v247
        %v249 = vlaneseq
        %v250 = vshrl.u32 %v249, 7
        %v251 = vsub.s32 0, %v250
        %v252 = vrot.slane %v237, %v251
        %v253 = vmul.f32 %v243, %v248
        %v254 = vmul.f32 %v243, %v252
        %v255 = vld [vmem:[%s3] sm:$0xff]
        %257 = vset.pattern.permute.xlu0 0
        %258 = vperm.xlu0 %257, %v255
        %v259 = vpop.permute.xlu0 %258
        %v261 = vadd.f32 %v253, %v259
        %v262 = vadd.f32 %v254, %v259
        %263 = vset.pattern.permute.xlu0 1
        %264 = vperm.xlu0 %263, %v239
        %v265 = vpop.permute.xlu0 %264
        %v267 = vlaneseq
        %v268 = vshrl.u32 %v267, 7
        %v269 = vsub.s32 1, %v268
        %v270 = vrot.slane %v236, %v269
        %v271 = vlaneseq
        %v272 = vshrl.u32 %v271, 7
        %v273 = vsub.s32 1, %v272
        %v274 = vrot.slane %v237, %v273
        %v275 = vmul.f32 %v265, %v270
        %v276 = vmul.f32 %v265, %v274
        %v277 = vadd.f32 %v261, %v275
        %v278 = vadd.f32 %v262, %v276
        %279 = vset.pattern.permute.xlu0 2
        %280 = vperm.xlu0 %279, %v239
        %v281 = vpop.permute.xlu0 %280
        %v283 = vlaneseq
        %v284 = vshrl.u32 %v283, 7
        %v285 = vsub.s32 2, %v284
        %v286 = vrot.slane %v236, %v285
        %v287 = vlaneseq
        %v288 = vshrl.u32 %v287, 7
        %v289 = vsub.s32 2, %v288
        %v290 = vrot.slane %v237, %v289
        %v291 = vmul.f32 %v281, %v286
        %v292 = vmul.f32 %v281, %v290
        %v293 = vadd.f32 %v277, %v291
        %v294 = vadd.f32 %v278, %v292
        %295 = vset.pattern.permute.xlu0 3
        %296 = vperm.xlu0 %295, %v239
        %v297 = vpop.permute.xlu0 %296
        %v299 = vlaneseq
        %v300 = vshrl.u32 %v299, 7
        %v301 = vsub.s32 3, %v300
        %v302 = vrot.slane %v236, %v301
        %v303 = vlaneseq
        %v304 = vshrl.u32 %v303, 7
        %v305 = vsub.s32 3, %v304
        %v306 = vrot.slane %v237, %v305
        %v307 = vmul.f32 %v297, %v302
        %v308 = vmul.f32 %v297, %v306
        %v309 = vadd.f32 %v293, %v307
        %v310 = vadd.f32 %v294, %v308
        %311 = vset.pattern.permute.xlu0 4
        %312 = vperm.xlu0 %311, %v239
        %v313 = vpop.permute.xlu0 %312
        %v315 = vlaneseq
        %v316 = vshrl.u32 %v315, 7
        %v317 = vsub.s32 4, %v316
        %v318 = vrot.slane %v236, %v317
        %v319 = vlaneseq
        %v320 = vshrl.u32 %v319, 7
        %v321 = vsub.s32 4, %v320
        %v322 = vrot.slane %v237, %v321
        %v323 = vmul.f32 %v313, %v318
        %v324 = vmul.f32 %v313, %v322
        %v325 = vadd.f32 %v309, %v323
        %v326 = vadd.f32 %v310, %v324
        %327 = vset.pattern.permute.xlu0 5
        %328 = vperm.xlu0 %327, %v239
        %v329 = vpop.permute.xlu0 %328
        %v331 = vlaneseq
        %v332 = vshrl.u32 %v331, 7
        %v333 = vsub.s32 5, %v332
        %v334 = vrot.slane %v236, %v333
        %v335 = vlaneseq
        %v336 = vshrl.u32 %v335, 7
        %v337 = vsub.s32 5, %v336
        %v338 = vrot.slane %v237, %v337
        %v339 = vmul.f32 %v329, %v334
        %v340 = vmul.f32 %v329, %v338
        %v341 = vadd.f32 %v325, %v339
        %v342 = vadd.f32 %v326, %v340
        %343 = vset.pattern.permute.xlu0 6
        %344 = vperm.xlu0 %343, %v239
        %v345 = vpop.permute.xlu0 %344
        %v347 = vlaneseq
        %v348 = vshrl.u32 %v347, 7
        %v349 = vsub.s32 6, %v348
        %v350 = vrot.slane %v236, %v349
        %v351 = vlaneseq
        %v352 = vshrl.u32 %v351, 7
        %v353 = vsub.s32 6, %v352
        %v354 = vrot.slane %v237, %v353
        %v355 = vmul.f32 %v345, %v350
        %v356 = vmul.f32 %v345, %v354
        %v357 = vadd.f32 %v341, %v355
        %v358 = vadd.f32 %v342, %v356
        %359 = vset.pattern.permute.xlu0 7
        %360 = vperm.xlu0 %359, %v239
        %v361 = vpop.permute.xlu0 %360
        %v363 = vlaneseq
        %v364 = vshrl.u32 %v363, 7
        %v365 = vsub.s32 7, %v364
        %v366 = vrot.slane %v236, %v365
        %v367 = vlaneseq
        %v368 = vshrl.u32 %v367, 7
        %v369 = vsub.s32 7, %v368
        %v370 = vrot.slane %v237, %v369
        %v371 = vmul.f32 %v361, %v366
        %v372 = vmul.f32 %v361, %v370
        %v373 = vadd.f32 %v357, %v371
        %v374 = vadd.f32 %v358, %v372
        %s375 = sadd.s32 %s225, 3
        %s376 = sld [smem:[#allocation4 + %s375]]
        %v377 = vstv %s376
        %v378 = vmul.f32 %v377, %v236
        %v379 = vmul.f32 %v377, %v237
        %s380 = sadd.s32 %s225, 4
        %s381 = sld [smem:[#allocation4 + %s380]]
        %v382 = vtanh.pop %v373
        %v383 = vtanh.pop %v374
        %v384 = vstv %s381
        %v385 = vmul.f32 %v384, %v382
        %v386 = vmul.f32 %v384, %v383
        %v387 = vadd.f32 %v378, %v385
        %v388 = vadd.f32 %v379, %v386
        %s389 = sld [smem:[#allocation4 + %s225]]
        %v390 = vstv %s389
        %v391 = vmul.f32 %v390, %v236
        %v392 = vmul.f32 %v390, %v237
        %s393 = sadd.s32 %s225, 1
        %s394 = sld [smem:[#allocation4 + %s393]]
        %v395 = vstv %s394
        %v396 = vmul.f32 %v395, %v387
        %v397 = vmul.f32 %v395, %v388
        %v398 = vadd.f32 %v391, %v396
        %v399 = vadd.f32 %v392, %v397
        %s400 = sadd.s32 %s225, 2
        %s401 = sld [smem:[#allocation4 + %s400]]
        %v402 = vld [vmem:[#allocation2] sm:$0xff]
        %v403 = vld [vmem:[#allocation2 + $0x8] sm:$0xff]
        %v404 = vstv %s401
        %v405 = vmul.f32 %v404, %v402
        %v406 = vmul.f32 %v404, %v403
        %v407 = vadd.f32 %v398, %v405
        %v408 = vadd.f32 %v399, %v406
        %409 = vst [vmem:[%s216] sm:$0xff] %v407
        %410 = vst [vmem:[%s216 + $0x8] sm:$0xff] %v408
        %411 = vst [vmem:[#allocation5] sm:$0xff] %v407
        %412 = vst [vmem:[#allocation5 + $0x8] sm:$0xff] %v408
        %413 = vst [vmem:[#allocation2] sm:$0xff] %v387
        %414 = vst [vmem:[#allocation2 + $0x8] sm:$0xff] %v388
        %p415 = scmp.eq.s32.totalorder %s32, 7
        // Predicated region
        $region37: #{tpu_custom_call.1} parent=31 // pred_check
          %p416 = pneg %p415
        $region38: #{tpu_custom_call.1} parent=31 // pred_check_branch
          %418 = sbr.rel (%p416) target = $region40
        $region39: #{tpu_custom_call.1} parent=31 // pred_region
          %s419 = scalar_lea.vmem %s2, 64
          %v420 = vld [vmem:[%s419] sm:$0xff]
          %422 = vset.pattern.permute.xlu0 0
          %423 = vperm.xlu0 %422, %v420
          %v424 = vpop.permute.xlu0 %423
          %v426 = vlaneseq
          %v427 = vshrl.u32 %v426, 7
          %v428 = vsub.s32 0, %v427
          %v429 = vrot.slane %v407, %v428
          %v430 = vlaneseq
          %v431 = vshrl.u32 %v430, 7
          %v432 = vsub.s32 0, %v431
          %v433 = vrot.slane %v408, %v432
          %v434 = vmul.f32 %v424, %v429
          %v435 = vmul.f32 %v424, %v433
          %v436 = vld [vmem:[%s3] sm:$0xff]
          %438 = vset.pattern.permute.xlu0 0
          %439 = vperm.xlu0 %438, %v436
          %v440 = vpop.permute.xlu0 %439
          %v442 = vadd.f32 %v434, %v440
          %v443 = vadd.f32 %v435, %v440
          %444 = vset.pattern.permute.xlu0 1
          %445 = vperm.xlu0 %444, %v420
          %v446 = vpop.permute.xlu0 %445
          %v448 = vlaneseq
          %v449 = vshrl.u32 %v448, 7
          %v450 = vsub.s32 1, %v449
          %v451 = vrot.slane %v407, %v450
          %v452 = vlaneseq
          %v453 = vshrl.u32 %v452, 7
          %v454 = vsub.s32 1, %v453
          %v455 = vrot.slane %v408, %v454
          %v456 = vmul.f32 %v446, %v451
          %v457 = vmul.f32 %v446, %v455
          %v458 = vadd.f32 %v442, %v456
          %v459 = vadd.f32 %v443, %v457
          %460 = vset.pattern.permute.xlu0 2
          %461 = vperm.xlu0 %460, %v420
          %v462 = vpop.permute.xlu0 %461
          %v464 = vlaneseq
          %v465 = vshrl.u32 %v464, 7
          %v466 = vsub.s32 2, %v465
          %v467 = vrot.slane %v407, %v466
          %v468 = vlaneseq
          %v469 = vshrl.u32 %v468, 7
          %v470 = vsub.s32 2, %v469
          %v471 = vrot.slane %v408, %v470
          %v472 = vmul.f32 %v462, %v467
          %v473 = vmul.f32 %v462, %v471
          %v474 = vadd.f32 %v458, %v472
          %v475 = vadd.f32 %v459, %v473
          %476 = vset.pattern.permute.xlu0 3
          %477 = vperm.xlu0 %476, %v420
          %v478 = vpop.permute.xlu0 %477
          %v480 = vlaneseq
          %v481 = vshrl.u32 %v480, 7
          %v482 = vsub.s32 3, %v481
          %v483 = vrot.slane %v407, %v482
          %v484 = vlaneseq
          %v485 = vshrl.u32 %v484, 7
          %v486 = vsub.s32 3, %v485
          %v487 = vrot.slane %v408, %v486
          %v488 = vmul.f32 %v478, %v483
          %v489 = vmul.f32 %v478, %v487
          %v490 = vadd.f32 %v474, %v488
          %v491 = vadd.f32 %v475, %v489
          %492 = vset.pattern.permute.xlu0 4
          %493 = vperm.xlu0 %492, %v420
          %v494 = vpop.permute.xlu0 %493
          %v496 = vlaneseq
          %v497 = vshrl.u32 %v496, 7
          %v498 = vsub.s32 4, %v497
          %v499 = vrot.slane %v407, %v498
          %v500 = vlaneseq
          %v501 = vshrl.u32 %v500, 7
          %v502 = vsub.s32 4, %v501
          %v503 = vrot.slane %v408, %v502
          %v504 = vmul.f32 %v494, %v499
          %v505 = vmul.f32 %v494, %v503
          %v506 = vadd.f32 %v490, %v504
          %v507 = vadd.f32 %v491, %v505
          %508 = vset.pattern.permute.xlu0 5
          %509 = vperm.xlu0 %508, %v420
          %v510 = vpop.permute.xlu0 %509
          %v512 = vlaneseq
          %v513 = vshrl.u32 %v512, 7
          %v514 = vsub.s32 5, %v513
          %v515 = vrot.slane %v407, %v514
          %v516 = vlaneseq
          %v517 = vshrl.u32 %v516, 7
          %v518 = vsub.s32 5, %v517
          %v519 = vrot.slane %v408, %v518
          %v520 = vmul.f32 %v510, %v515
          %v521 = vmul.f32 %v510, %v519
          %v522 = vadd.f32 %v506, %v520
          %v523 = vadd.f32 %v507, %v521
          %524 = vset.pattern.permute.xlu0 6
          %525 = vperm.xlu0 %524, %v420
          %v526 = vpop.permute.xlu0 %525
          %v528 = vlaneseq
          %v529 = vshrl.u32 %v528, 7
          %v530 = vsub.s32 6, %v529
          %v531 = vrot.slane %v407, %v530
          %v532 = vlaneseq
          %v533 = vshrl.u32 %v532, 7
          %v534 = vsub.s32 6, %v533
          %v535 = vrot.slane %v408, %v534
          %v536 = vmul.f32 %v526, %v531
          %v537 = vmul.f32 %v526, %v535
          %v538 = vadd.f32 %v522, %v536
          %v539 = vadd.f32 %v523, %v537
          %540 = vset.pattern.permute.xlu0 7
          %541 = vperm.xlu0 %540, %v420
          %v542 = vpop.permute.xlu0 %541
          %v544 = vlaneseq
          %v545 = vshrl.u32 %v544, 7
          %v546 = vsub.s32 7, %v545
          %v547 = vrot.slane %v407, %v546
          %v548 = vlaneseq
          %v549 = vshrl.u32 %v548, 7
          %v550 = vsub.s32 7, %v549
          %v551 = vrot.slane %v408, %v550
          %v552 = vmul.f32 %v542, %v547
          %v553 = vmul.f32 %v542, %v551
          %v554 = vadd.f32 %v538, %v552
          %v555 = vadd.f32 %v539, %v553
          %s556 = sld [smem:[#allocation4 + $0x43]]
          %v557 = vstv %s556
          %v558 = vmul.f32 %v557, %v407
          %v559 = vmul.f32 %v557, %v408
          %s560 = sld [smem:[#allocation4 + $0x44]]
          %v561 = vtanh.pop %v554
          %v562 = vtanh.pop %v555
          %v563 = vstv %s560
          %v564 = vmul.f32 %v563, %v561
          %v565 = vmul.f32 %v563, %v562
          %v566 = vadd.f32 %v558, %v564
          %v567 = vadd.f32 %v559, %v565
          %568 = vst [vmem:[#allocation5] sm:$0xff] %v566
          %569 = vst [vmem:[#allocation5 + $0x8] sm:$0xff] %v567
        $region40: #{tpu_custom_call.1} parent=31 // pred_fallthru
          _
        %s570 = sand.u32 %s143, 1
        %s571 = scalar_lea.sflag [#allocation8], %s570
        %s572 = sand.u32 %s143, 1
        %s573 = smul.addr %s572, 16
        %s574 = scalar_lea.vmem [#allocation7], %s573
        // Predicated region
        $region41: #{tpu_custom_call.1} parent=31 // pred_check
          %p575 = pneg %p125
        $region42: #{tpu_custom_call.1} parent=31 // pred_check_branch
          %577 = sbr.rel (%p575) target = $region44
        $region43: #{tpu_custom_call.1} parent=31 // pred_region
          %s578 = smul.u32 2, %s31
          %s580 = ssub.s32 256, 256
          %581 = vsyncadd [#allocation6], %s580
          %s582 = smul.addr %s578, 128
          %s583 = scalar_lea.hbm %s4, %s582
          %s585 = sshll.u32 [#allocation5], 4
          %s586 = int_to_ptr.vmem [resolvable:$true] %s585
          %588 = dma.vmem_to_hbm [thread:$0]  %s586, 256, %s583, [#allocation6]
        $region44: #{tpu_custom_call.1} parent=31 // pred_fallthru
          _
        // Predicated region
        $region45: #{tpu_custom_call.1} parent=31 // pred_check
          %p589 = pneg %p153
        $region46: #{tpu_custom_call.1} parent=31 // pred_check_branch
          %591 = sbr.rel (%p589) target = $region48
        $region47: #{tpu_custom_call.1} parent=31 // pred_region
          %s592 = smul.u32 2, %s31
          %s594 = ssub.s32 256, 256
          %595 = vsyncadd %s571, %s594
          %s596 = smul.addr %s32, 2
          %s597 = sadd.s32 %s592, %s596
          %s598 = smul.addr %s597, 128
          %s599 = scalar_lea.hbm %s5, %s598
          %s601 = sshll.u32 %s574, 4
          %s602 = int_to_ptr.vmem [resolvable:$true] %s601
          %604 = dma.vmem_to_hbm [thread:$0]  %s602, 256, %s599, %s571
        $region48: #{tpu_custom_call.1} parent=31 // pred_fallthru
          _
        // Predicated region
        $region49: #{tpu_custom_call.1} parent=31 // pred_check
          %p605 = pneg %p125
        $region50: #{tpu_custom_call.1} parent=31 // pred_check_branch
          %607 = sbr.rel (%p605) target = $region52
        $region51: #{tpu_custom_call.1} parent=31 // pred_region
          %608 = dma.done [#allocation6], 256
        $region52: #{tpu_custom_call.1} parent=31 // pred_fallthru
          _
      $region32: #{tpu_custom_call.1} parent=5 // pred_fallthru
        _
      %p609 = scmp.le.s32.totalorder 2, %s22
      // Predicated region
      $region53: #{tpu_custom_call.1} parent=5 // pred_check
        %p610 = pneg %p609
      $region54: #{tpu_custom_call.1} parent=5 // pred_check_branch
        %612 = sbr.rel (%p610) target = $region56
      $region55: #{tpu_custom_call.1} parent=5 // pred_region
        %s613 = ssub.s32 %s22, 2
        // Predicated region
        $region57: #{tpu_custom_call.1} parent=55 // pred_check
          %p614 = pneg %p159
        $region58: #{tpu_custom_call.1} parent=55 // pred_check_branch
          %616 = sbr.rel (%p614) target = $region60
        $region59: #{tpu_custom_call.1} parent=55 // pred_region
          %s617 = sand.u32 %s144, 1
          %s618 = scalar_lea.sflag [#allocation8], %s617
          %s619 = sand.u32 %s144, 1
          %s620 = smul.addr %s619, 16
          %s621 = scalar_lea.vmem [#allocation7], %s620
          %622 = dma.done %s618, 256
        $region60: #{tpu_custom_call.1} parent=55 // pred_fallthru
          _
      $region56: #{tpu_custom_call.1} parent=5 // pred_fallthru
        _
    $region6: #{tpu_custom_call.1} parent=1 // loop_footer
      %s26 = sadd.s32 1, %s22
    $region7: #{tpu_custom_call.1} parent=1 // loop_footer_branch
      %21 = sbr.rel target = $region3
    $region8: #{tpu_custom_call.1} parent=1 // loop_exit
      _
    %623 = vsyncpa [#allocation6], 1
    %s624 = scalar_lea.sflag [#allocation6], 1
    %625 = vsyncpa %s624, 1
    %626 = vsyncpa [#allocation8], 1
    %s627 = scalar_lea.sflag [#allocation8], 1
    %628 = vsyncpa %s627, 1

</llo_original>
